<compile_context>
chip_gen: v7x
topology: tpu7x:2x2x1
jax: 0.10.0
libtpu: 0.0.40
codegen_flags: <defaults>
</compile_context>

<pallas_src>
import functools

import jax
import jax.numpy as jnp
from jax import lax
from jax.experimental import pallas as pl
from jax.experimental.pallas import tpu as pltpu


_LANE = 128
_ACC_BUDGET = 128 * 1024        # combined f32 vector-accumulator bytes (vreg file = 256 KiB)
_CHUNK_BUDGET = 96 * 1024       # per-chunk f32 footprint for the streaming sweeps
_MAX_STATIC_STEPS = 16          # static unroll limit before switching to fori_loop
_MAX_GROUPS = 32                # static unroll limit for the pooling row-group loop


def _channel_gate_kernel(x_ref, w1t_ref, b1_ref, w2t_ref, b2_ref, o_ref, *,
                         Bt, C, HW, B_total, Bg, CHg, vec_pool, gate_dtype):
    f32 = jnp.float32
    n128 = HW // _LANE                     # full 128-lane sub-blocks
    tail = HW - n128 * _LANE               # ragged remainder (no padding anywhere)

    # ---- fused single-pass avg + max pooling over the spatial (lane) axis ----
    if vec_pool:
        # VPU-only accumulation: fold each 128-lane sub-block with add/max into
        # (rows, C, 128) f32 accumulators; ONE lane-reduction per group at the end.
        sums, maxs = [], []
        for g in range(0, Bt, Bg):
            rows = min(Bg, Bt - g)
            rs = slice(g, g + rows)
            if n128 > 0:
                if n128 <= _MAX_STATIC_STEPS:
                    s_vec = x_ref[rs, :, 0:_LANE].astype(f32)
                    m_vec = s_vec
                    for i in range(1, n128):
                        xc = x_ref[rs, :, i * _LANE:(i + 1) * _LANE].astype(f32)
                        s_vec = s_vec + xc
                        m_vec = jnp.maximum(m_vec, xc)
                else:
                    def body(i, carry, rs=rs):
                        s_vec, m_vec = carry
                        start = pl.multiple_of(i * _LANE, _LANE)
                        xc = x_ref[rs, :, pl.ds(start, _LANE)].astype(f32)
                        return s_vec + xc, jnp.maximum(m_vec, xc)
                    s_vec, m_vec = lax.fori_loop(
                        0, n128, body,
                        (jnp.zeros((rows, C, _LANE), f32),
                         jnp.full((rows, C, _LANE), -jnp.inf, f32)),
                        unroll=4)
                s_g = jnp.sum(s_vec, axis=-1)
                m_g = jnp.max(m_vec, axis=-1)
            else:
                s_g = jnp.zeros((rows, C), f32)
                m_g = jnp.full((rows, C), -jnp.inf, f32)
            if tail:
                xt = x_ref[rs, :, n128 * _LANE:HW].astype(f32)
                s_g = s_g + jnp.sum(xt, axis=-1)
                m_g = jnp.maximum(m_g, jnp.max(xt, axis=-1))
            sums.append(s_g)
            maxs.append(m_g)
        s_acc = sums[0] if len(sums) == 1 else jnp.concatenate(sums, axis=0)
        m_acc = maxs[0] if len(maxs) == 1 else jnp.concatenate(maxs, axis=0)
    else:
        # Fallback for very large C (vector accumulators would spill): per-chunk
        # cross-lane reduction on the full (Bt, C) tile.
        def fold(carry, xc):
            s_a, m_a = carry
            return (s_a + jnp.sum(xc, axis=-1),
                    jnp.maximum(m_a, jnp.max(xc, axis=-1)))
        s_acc = jnp.zeros((Bt, C), f32)
        m_acc = jnp.full((Bt, C), -jnp.inf, f32)
        if n128 > 0:
            if n128 <= _MAX_STATIC_STEPS:
                for i in range(n128):
                    xc = x_ref[:, :, i * _LANE:(i + 1) * _LANE].astype(f32)
                    s_acc, m_acc = fold((s_acc, m_acc), xc)
            else:
                def body(i, carry):
                    start = pl.multiple_of(i * _LANE, _LANE)
                    xc = x_ref[:, :, pl.ds(start, _LANE)].astype(f32)
                    return fold(carry, xc)
                s_acc, m_acc = lax.fori_loop(0, n128, body, (s_acc, m_acc),
                                             unroll=4)
        if tail:
            xt = x_ref[:, :, n128 * _LANE:HW].astype(f32)
            s_acc, m_acc = fold((s_acc, m_acc), xt)

    # ---- ragged last batch tile: keep garbage rows out of the MLP ------------
    if B_total % Bt != 0:
        row = lax.broadcasted_iota(jnp.int32, (Bt, C), 0)
        valid = row < (B_total - pl.program_id(0) * Bt)
        s_acc = jnp.where(valid, s_acc, 0.0)
        m_acc = jnp.where(valid, m_acc, 0.0)

    # ---- shared MLP applied to both pooled vectors with ONE pair of matmuls --
    avg = s_acc * (1.0 / HW)
    p = jnp.concatenate([avg, m_acc], axis=0)                      # (2*Bt, C)
    h = jnp.dot(p, w1t_ref[...], preferred_element_type=f32) + b1_ref[...]
    h = jnp.maximum(h, 0.0)                                        # ReLU
    att = jnp.dot(h, w2t_ref[...], preferred_element_type=f32) + b2_ref[...]
    # channel_att_sum = mlp(avg) + mlp(max)
    scale = jax.nn.sigmoid(att[:Bt] + att[Bt:]).astype(gate_dtype)  # (Bt, C)

    # ---- gating sweep: out = x * sigmoid(...) --------------------------------
    # Gate broadcast hoisted ONCE (JAX does not CSE broadcast_in_dim in loops).
    n_g = HW // CHg
    tail_g = HW - n_g * CHg
    scale_b = jnp.broadcast_to(scale[:, :, None], (Bt, C, CHg))
    if n_g > 0:
        if n_g <= _MAX_STATIC_STEPS:
            for i in range(n_g):
                sl = slice(i * CHg, (i + 1) * CHg)
                o_ref[:, :, sl] = (x_ref[:, :, sl].astype(gate_dtype)
                                   * scale_b).astype(o_ref.dtype)
        else:
            def gbody(i, carry):
                start = pl.multiple_of(i * CHg, _LANE)
                sl = pl.ds(start, CHg)
                o_ref[:, :, sl] = (x_ref[:, :, sl].astype(gate_dtype)
                                   * scale_b).astype(o_ref.dtype)
                return carry
            lax.fori_loop(0, n_g, gbody, 0, unroll=4)
    if tail_g:
        sl = slice(n_g * CHg, HW)
        o_ref[:, :, sl] = (x_ref[:, :, sl].astype(gate_dtype)
                           * scale_b[:, :, :tail_g]).astype(o_ref.dtype)


def _vmem_capacity_bytes():
    try:
        info = pltpu.get_tpu_info()
        cap = getattr(info, "vmem_capacity_bytes", None)
        if cap:
            return int(cap)
    except Exception:
        pass
    return 64 * 1024 * 1024      # conservative default: v7x per-core VMEM


def _choose_bt(B, per_row_bytes, vmem_cap):
    """Batch-tile size from bytes: big enough to amortize the ~0.35us per-step
    cost and reach HBM roofline; smaller target on VMEM-tight chips (v7x)."""
    target = (2 << 20) if vmem_cap <= (64 << 20) else (4 << 20)
    bt = max(1, min(B, target // max(per_row_bytes, 1)))
    # Prefer >= 4 (else >= 2) grid steps for megacore + pipelining overlap, but
    # only while blocks stay >= ~1 MiB (never split into overhead-bound tiles).
    min_block = 1 << 20
    for steps in (4, 2):
        bt_s = -(-B // steps)
        if bt_s < bt and bt_s * per_row_bytes >= min_block:
            bt = bt_s
            break
    return bt


def _prefer_divisor(B, bt):
    """Avoid a ragged last batch tile when a nearby divisor of B exists."""
    for d in range(min(bt, B), max(1, bt // 2) - 1, -1):
        if B % d == 0:
            return d
    return bt


def _chunk_lanes(rows, C, HW):
    """Largest 128-multiple chunk whose f32 footprint stays under ~96 KiB
    (<= ~1/3 of the 256 KiB vreg file, avoiding spills in the sweeps)."""
    ch = max(_LANE, (_CHUNK_BUDGET // max(1, rows * C * 4)) // _LANE * _LANE)
    full = -(-HW // _LANE) * _LANE
    return min(ch, max(_LANE, full))


def _make_call(kernel, x_dtype, B, C, Cr, HW, Bt, vmem_limit, single_buffer_consts):
    def const_spec(shape):
        idx_map = lambda b: (0,) * len(shape)
        if single_buffer_consts:
            # Constant-index operands only need ONE pipeline buffer (saves the
            # duplicate weight copy — matters inside v7x's 64 MiB VMEM).
            return pl.BlockSpec(shape, idx_map, pipeline_mode=pl.Buffered(1))
        return pl.BlockSpec(shape, idx_map)

    return pl.pallas_call(
        kernel,
        out_shape=jax.ShapeDtypeStruct((B, C, HW), x_dtype),
        grid_spec=pltpu.PrefetchScalarGridSpec(
            num_scalar_prefetch=0,
            grid=(pl.cdiv(B, Bt),),
            in_specs=[
                pl.BlockSpec((Bt, C, HW), lambda b: (b, 0, 0)),
                const_spec((C, Cr)),
                const_spec((1, Cr)),
                const_spec((Cr, C)),
                const_spec((1, C)),
            ],
            out_specs=pl.BlockSpec((Bt, C, HW), lambda b: (b, 0, 0)),
        ),
        compiler_params=pltpu.CompilerParams(
            dimension_semantics=("parallel",),
            vmem_limit_bytes=vmem_limit,
        ),
    )


def channel_gate(x, w1, b1, w2, b2):
    """ChannelGate forward.  x: (B, C, H, W).  Weights in PyTorch nn.Linear
    layout: w1: (C//r, C), b1: (C//r,), w2: (C, C//r), b2: (C,)."""
    B, C, H, W = x.shape
    Cr = w1.shape[0]
    HW = H * W
    itemsize = x.dtype.itemsize
    per_row_bytes = C * HW * itemsize

    vmem_cap = _vmem_capacity_bytes()
    Bt = _choose_bt(B, per_row_bytes, vmem_cap)

    # Pooling strategy: vector accumulation when the (rows, C, 128) f32
    # accumulators fit in the vreg file; otherwise per-chunk cross-lane reduce
    # (very-large-C case, where HW is typically small anyway).
    vec_pool = (2 * C * _LANE * 4) <= _ACC_BUDGET        # i.e. C <= 128
    if vec_pool:
        Bg = max(1, _ACC_BUDGET // (2 * C * _LANE * 4))   # batch rows per group
        Bt = min(Bt, Bg * _MAX_GROUPS)                    # bound static unrolling
    else:
        Bg = 1

    Bt = _prefer_divisor(B, Bt)

    # Keep 2x-in + 2x-out double buffering (+ weights + slack) under ~3/4 of
    # the physical per-core VMEM (64 MiB on v7x, 128 MiB on v5e/v6e).
    vmem_cap_use = (vmem_cap * 3) // 4
    w_bytes = 4 * (2 * C * Cr + C + Cr)

    def need(bt):
        return 4 * bt * per_row_bytes + 2 * w_bytes + (2 << 20)

    while Bt > 1 and need(Bt) > vmem_cap_use:
        Bt -= 1
    # TODO(synk): if even Bt=1 exceeds VMEM (huge C*H*W), an HW-tiled two-pass
    # variant with scratch accumulators would be required.

    CHg = _chunk_lanes(Bt, C, HW)
    # Native bf16 gating on bf16 inputs (v6e/v7x have bf16 VALUs).
    # TODO(synk): on v5e (no bf16 VALU) f32 gating would avoid emulated bf16 mults.
    gate_dtype = jnp.bfloat16 if x.dtype == jnp.bfloat16 else jnp.float32

    x_flat = x.reshape(B, C, HW)                     # free trailing-dim merge
    w1t = jnp.asarray(w1, jnp.float32).T             # (C, Cr)
    w2t = jnp.asarray(w2, jnp.float32).T             # (Cr, C)
    b1_2d = jnp.asarray(b1, jnp.float32).reshape(1, Cr)
    b2_2d = jnp.asarray(b2, jnp.float32).reshape(1, C)

    kernel = functools.partial(
        _channel_gate_kernel, Bt=Bt, C=C, HW=HW, B_total=B, Bg=Bg, CHg=CHg,
        vec_pool=vec_pool, gate_dtype=gate_dtype)

    vmem_limit = int(min(vmem_cap_use, max(16 << 20, need(Bt))))
    args = (x_flat, w1t, b1_2d, w2t, b2_2d)
    try:
        out_flat = _make_call(kernel, x.dtype, B, C, Cr, HW, Bt, vmem_limit,
                              single_buffer_consts=True)(*args)
    except Exception:
        # Fallback for Pallas versions without BlockSpec(pipeline_mode=...).
        out_flat = _make_call(kernel, x.dtype, B, C, Cr, HW, Bt, vmem_limit,
                              single_buffer_consts=False)(*args)

    return out_flat.reshape(B, C, H, W)


def cbam_forward(x, w1, b1, w2, b2):
    # CBAM default is no_spatial=True, so forward(x) == ChannelGate(x).
    # TODO(synk): SpatialGate path (no_spatial=False: channel-pool + 7x7 conv + BN)
    # is not part of the default forward and is not implemented here.
    return channel_gate(x, w1, b1, w2, b2)


def cbam_ref(x, w1, b1, w2, b2):
    # Pure-JAX reference mirroring the PyTorch forward.
    avg = jnp.mean(x, axis=(2, 3))            # (B, C)
    mx = jnp.max(x, axis=(2, 3))              # (B, C)

    def mlp(p):
        h = jnp.maximum(p @ w1.T + b1, 0.0)
        return h @ w2.T + b2

    att = mlp(avg) + mlp(mx)                  # (B, C)
    scale = jax.nn.sigmoid(att)[:, :, None, None]
    return x * scale


if __name__ == "__main__":
    # CBAM(gate_channels=32, reduction_ratio=16, pool_types=['avg','max'], no_spatial=True)
    B, C, H, W = 2, 32, 16, 16
    r = 16
    Cr = C // r

    key = jax.random.PRNGKey(0)
    kx, k1, k2, k3, k4 = jax.random.split(key, 5)

    x = jax.random.normal(kx, (B, C, H, W), dtype=jnp.float32)

    # Deterministic parameter init (PyTorch-Linear-style uniform bounds).
    bound1 = 1.0 / (C ** 0.5)
    bound2 = 1.0 / (Cr ** 0.5)
    w1 = jax.random.uniform(k1, (Cr, C), jnp.float32, -bound1, bound1)
    b1 = jax.random.uniform(k2, (Cr,), jnp.float32, -bound1, bound1)
    w2 = jax.random.uniform(k3, (C, Cr), jnp.float32, -bound2, bound2)
    b2 = jax.random.uniform(k4, (C,), jnp.float32, -bound2, bound2)

    out = cbam_forward(x, w1, b1, w2, b2)
    out = jax.block_until_ready(out)

    ref = cbam_ref(x, w1, b1, w2, b2)
    assert out.shape == ref.shape, "shape mismatch vs reference"
    assert jnp.allclose(out, ref, atol=2e-5, rtol=2e-5), "mismatch vs reference"

    print("KERNEL_OK")
</pallas_src>

<mosaic_0001>
module attributes {stable_mosaic.version = 11 : i64} {
  func.func @_channel_gate_kernel(%arg0: i32, %arg1: memref<2x32x256xf32, #tpu.memory_space<vmem>>, %arg2: memref<32x2xf32, #tpu.memory_space<vmem>>, %arg3: memref<1x2xf32, #tpu.memory_space<vmem>>, %arg4: memref<2x32xf32, #tpu.memory_space<vmem>>, %arg5: memref<1x32xf32, #tpu.memory_space<vmem>>, %arg6: memref<2x32x256xf32, #tpu.memory_space<vmem>>) attributes {dimension_semantics = [#tpu.dimension_semantics<parallel>], iteration_bounds = array<i64: 1>, scalar_prefetch = 0 : i64, scratch_operands = 0 : i64, tpu.core_type = #tpu.core_type<tc>, window_params = [{transform_indices = @transform_0, window_bounds = array<i64: 2, 32, 256>}, {pipeline_mode = #tpu.pipeline_mode<synchronous>, transform_indices = @transform_1, window_bounds = array<i64: 32, 2>}, {pipeline_mode = #tpu.pipeline_mode<synchronous>, transform_indices = @transform_2, window_bounds = array<i64: 1, 2>}, {pipeline_mode = #tpu.pipeline_mode<synchronous>, transform_indices = @transform_3, window_bounds = array<i64: 2, 32>}, {pipeline_mode = #tpu.pipeline_mode<synchronous>, transform_indices = @transform_4, window_bounds = array<i64: 1, 32>}, {transform_indices = @transform_5, window_bounds = array<i64: 2, 32, 256>}]} {
    %c0 = arith.constant 0 : index
    %c0_0 = arith.constant 0 : index
    %c0_1 = arith.constant 0 : index
    %0 = vector.load %arg1[%c0, %c0_0, %c0_1] : memref<2x32x256xf32, #tpu.memory_space<vmem>>, vector<2x32x128xf32>
    %c0_2 = arith.constant 0 : index
    %c0_3 = arith.constant 0 : index
    %c128 = arith.constant 128 : index
    %1 = vector.load %arg1[%c0_2, %c0_3, %c128] : memref<2x32x256xf32, #tpu.memory_space<vmem>>, vector<2x32x128xf32>
    %2 = arith.addf %0, %1 : vector<2x32x128xf32>
    %3 = arith.maximumf %0, %1 : vector<2x32x128xf32>
    %cst = arith.constant dense<0.000000e+00> : vector<2x32xf32>
    %4 = vector.multi_reduction <add>, %2, %cst [2] : vector<2x32x128xf32> to vector<2x32xf32>
    %cst_4 = arith.constant dense<0xFF800000> : vector<2x32xf32>
    %5 = vector.multi_reduction <maximumf>, %3, %cst_4 [2] : vector<2x32x128xf32> to vector<2x32xf32>
    %cst_5 = arith.constant 3.906250e-03 : f32
    %6 = vector.broadcast %cst_5 : f32 to vector<2x32xf32>
    %7 = arith.mulf %4, %6 : vector<2x32xf32>
    %8 = tpu.concatenate %7, %5 in 0 : vector<2x32xf32>, vector<2x32xf32> -> vector<4x32xf32>
    %c0_6 = arith.constant 0 : index
    %c0_7 = arith.constant 0 : index
    %9 = vector.load %arg2[%c0_6, %c0_7] : memref<32x2xf32, #tpu.memory_space<vmem>>, vector<32x2xf32>
    %cst_8 = arith.constant dense<0.000000e+00> : vector<4x2xf32>
    %10 = tpu.matmul %8, %9, %cst_8 {dimension_numbers = #tpu.dot_dimension_numbers<[1], [0], [0], [1], [0, 0, 1, 1], [], []>} : vector<4x32xf32>, vector<32x2xf32>, vector<4x2xf32> -> vector<4x2xf32>
    %c0_9 = arith.constant 0 : index
    %c0_10 = arith.constant 0 : index
    %11 = vector.load %arg3[%c0_9, %c0_10] : memref<1x2xf32, #tpu.memory_space<vmem>>, vector<1x2xf32>
    %12 = vector.broadcast %11 : vector<1x2xf32> to vector<4x2xf32>
    %13 = arith.addf %10, %12 : vector<4x2xf32>
    %cst_11 = arith.constant 0.000000e+00 : f32
    %14 = vector.broadcast %cst_11 : f32 to vector<4x2xf32>
    %15 = arith.maximumf %13, %14 : vector<4x2xf32>
    %c0_12 = arith.constant 0 : index
    %c0_13 = arith.constant 0 : index
    %16 = vector.load %arg4[%c0_12, %c0_13] : memref<2x32xf32, #tpu.memory_space<vmem>>, vector<2x32xf32>
    %cst_14 = arith.constant dense<0.000000e+00> : vector<4x32xf32>
    %17 = tpu.matmul %15, %16, %cst_14 {dimension_numbers = #tpu.dot_dimension_numbers<[1], [0], [0], [1], [0, 0, 1, 1], [], []>} : vector<4x2xf32>, vector<2x32xf32>, vector<4x32xf32> -> vector<4x32xf32>
    %c0_15 = arith.constant 0 : index
    %c0_16 = arith.constant 0 : index
    %18 = vector.load %arg5[%c0_15, %c0_16] : memref<1x32xf32, #tpu.memory_space<vmem>>, vector<1x32xf32>
    %19 = vector.broadcast %18 : vector<1x32xf32> to vector<4x32xf32>
    %20 = arith.addf %17, %19 : vector<4x32xf32>
    %21 = vector.extract_strided_slice %20 {offsets = [0, 0], sizes = [2, 32], strides = [1, 1]} : vector<4x32xf32> to vector<2x32xf32>
    %22 = vector.extract_strided_slice %20 {offsets = [2, 0], sizes = [2, 32], strides = [1, 1]} : vector<4x32xf32> to vector<2x32xf32>
    %23 = arith.addf %21, %22 : vector<2x32xf32>
    %24 = arith.negf %23 : vector<2x32xf32>
    %25 = math.exp %24 : vector<2x32xf32>
    %cst_17 = arith.constant 1.000000e+00 : f32
    %26 = vector.broadcast %cst_17 : f32 to vector<2x32xf32>
    %27 = arith.addf %26, %25 : vector<2x32xf32>
    %28 = arith.divf %26, %27 : vector<2x32xf32>
    %29 = vector.shape_cast %28 : vector<2x32xf32> to vector<2x32x1xf32>
    %30 = vector.shape_cast %29 : vector<2x32x1xf32> to vector<2x32x1xf32>
    %31 = vector.broadcast %30 : vector<2x32x1xf32> to vector<2x32x256xf32>
    %c0_18 = arith.constant 0 : index
    %c0_19 = arith.constant 0 : index
    %c0_20 = arith.constant 0 : index
    %32 = vector.load %arg1[%c0_18, %c0_19, %c0_20] : memref<2x32x256xf32, #tpu.memory_space<vmem>>, vector<2x32x256xf32>
    %33 = arith.mulf %32, %31 : vector<2x32x256xf32>
    %c0_21 = arith.constant 0 : index
    %c0_22 = arith.constant 0 : index
    %c0_23 = arith.constant 0 : index
    %34 = vector.load %arg6[%c0_21, %c0_22, %c0_23] : memref<2x32x256xf32, #tpu.memory_space<vmem>>, vector<2x32x256xf32>
    tpu.vector_store %arg6[%c0_21, %c0_22, %c0_23], %33 {strides = array<i32>} : memref<2x32x256xf32, #tpu.memory_space<vmem>>, vector<2x32x256xf32>,
    return
  }
  func.func @transform_0(%arg0: i32) -> (i32, i32, i32) {
    %c0_i32 = arith.constant 0 : i32
    %c0_i32_0 = arith.constant 0 : i32
    %c0_i32_1 = arith.constant 0 : i32
    return %arg0, %c0_i32, %c0_i32_0 : i32, i32, i32
  }
  func.func @transform_1(%arg0: i32) -> (i32, i32) {
    %c0_i32 = arith.constant 0 : i32
    %c0_i32_0 = arith.constant 0 : i32
    %c0_i32_1 = arith.constant 0 : i32
    return %c0_i32, %c0_i32_0 : i32, i32
  }
  func.func @transform_2(%arg0: i32) -> (i32, i32) {
    %c0_i32 = arith.constant 0 : i32
    %c0_i32_0 = arith.constant 0 : i32
    %c0_i32_1 = arith.constant 0 : i32
    return %c0_i32, %c0_i32_0 : i32, i32
  }
  func.func @transform_3(%arg0: i32) -> (i32, i32) {
    %c0_i32 = arith.constant 0 : i32
    %c0_i32_0 = arith.constant 0 : i32
    %c0_i32_1 = arith.constant 0 : i32
    return %c0_i32, %c0_i32_0 : i32, i32
  }
  func.func @transform_4(%arg0: i32) -> (i32, i32) {
    %c0_i32 = arith.constant 0 : i32
    %c0_i32_0 = arith.constant 0 : i32
    %c0_i32_1 = arith.constant 0 : i32
    return %c0_i32, %c0_i32_0 : i32, i32
  }
  func.func @transform_5(%arg0: i32) -> (i32, i32, i32) {
    %c0_i32 = arith.constant 0 : i32
    %c0_i32_0 = arith.constant 0 : i32
    %c0_i32_1 = arith.constant 0 : i32
    return %arg0, %c0_i32, %c0_i32_0 : i32, i32, i32
  }
}

module attributes {stable_mosaic.version = 11 : i64} {
  func.func @_channel_gate_kernel(%arg0: i32, %arg1: memref<2x32x256xf32, #tpu.memory_space<vmem>>, %arg2: memref<32x2xf32, #tpu.memory_space<vmem>>, %arg3: memref<1x2xf32, #tpu.memory_space<vmem>>, %arg4: memref<2x32xf32, #tpu.memory_space<vmem>>, %arg5: memref<1x32xf32, #tpu.memory_space<vmem>>, %arg6: memref<2x32x256xf32, #tpu.memory_space<vmem>>) attributes {dimension_semantics = [#tpu.dimension_semantics<parallel>], iteration_bounds = array<i64: 1>, scalar_prefetch = 0 : i64, scratch_operands = 0 : i64, tpu.core_type = #tpu.core_type<tc>, window_params = [{transform_indices = @transform_0, window_bounds = array<i64: 2, 32, 256>}, {pipeline_mode = #tpu.pipeline_mode<synchronous>, transform_indices = @transform_1, window_bounds = array<i64: 32, 2>}, {pipeline_mode = #tpu.pipeline_mode<synchronous>, transform_indices = @transform_2, window_bounds = array<i64: 1, 2>}, {pipeline_mode = #tpu.pipeline_mode<synchronous>, transform_indices = @transform_3, window_bounds = array<i64: 2, 32>}, {pipeline_mode = #tpu.pipeline_mode<synchronous>, transform_indices = @transform_4, window_bounds = array<i64: 1, 32>}, {transform_indices = @transform_5, window_bounds = array<i64: 2, 32, 256>}]} {
    %c0 = arith.constant 0 : index
    %c0_0 = arith.constant 0 : index
    %c0_1 = arith.constant 0 : index
    %0 = vector.load %arg1[%c0, %c0_0, %c0_1] : memref<2x32x256xf32, #tpu.memory_space<vmem>>, vector<2x32x128xf32>
    %c0_2 = arith.constant 0 : index
    %c0_3 = arith.constant 0 : index
    %c128 = arith.constant 128 : index
    %1 = vector.load %arg1[%c0_2, %c0_3, %c128] : memref<2x32x256xf32, #tpu.memory_space<vmem>>, vector<2x32x128xf32>
    %2 = arith.addf %0, %1 : vector<2x32x128xf32>
    %3 = arith.maximumf %0, %1 : vector<2x32x128xf32>
    %cst = arith.constant dense<0.000000e+00> : vector<2x32xf32>
    %4 = vector.multi_reduction <add>, %2, %cst [2] : vector<2x32x128xf32> to vector<2x32xf32>
    %cst_4 = arith.constant dense<0xFF800000> : vector<2x32xf32>
    %5 = vector.multi_reduction <maximumf>, %3, %cst_4 [2] : vector<2x32x128xf32> to vector<2x32xf32>
    %cst_5 = arith.constant 3.906250e-03 : f32
    %6 = vector.broadcast %cst_5 : f32 to vector<2x32xf32>
    %7 = arith.mulf %4, %6 : vector<2x32xf32>
    %8 = tpu.concatenate %7, %5 in 0 : vector<2x32xf32>, vector<2x32xf32> -> vector<4x32xf32>
    %c0_6 = arith.constant 0 : index
    %c0_7 = arith.constant 0 : index
    %9 = vector.load %arg2[%c0_6, %c0_7] : memref<32x2xf32, #tpu.memory_space<vmem>>, vector<32x2xf32>
    %cst_8 = arith.constant dense<0.000000e+00> : vector<4x2xf32>
    %10 = tpu.matmul %8, %9, %cst_8 {dimension_numbers = #tpu.dot_dimension_numbers<[1], [0], [0], [1], [0, 0, 1, 1], [], []>} : vector<4x32xf32>, vector<32x2xf32>, vector<4x2xf32> -> vector<4x2xf32>
    %c0_9 = arith.constant 0 : index
    %c0_10 = arith.constant 0 : index
    %11 = vector.load %arg3[%c0_9, %c0_10] : memref<1x2xf32, #tpu.memory_space<vmem>>, vector<1x2xf32>
    %12 = vector.broadcast %11 : vector<1x2xf32> to vector<4x2xf32>
    %13 = arith.addf %10, %12 : vector<4x2xf32>
    %cst_11 = arith.constant 0.000000e+00 : f32
    %14 = vector.broadcast %cst_11 : f32 to vector<4x2xf32>
    %15 = arith.maximumf %13, %14 : vector<4x2xf32>
    %c0_12 = arith.constant 0 : index
    %c0_13 = arith.constant 0 : index
    %16 = vector.load %arg4[%c0_12, %c0_13] : memref<2x32xf32, #tpu.memory_space<vmem>>, vector<2x32xf32>
    %cst_14 = arith.constant dense<0.000000e+00> : vector<4x32xf32>
    %17 = tpu.matmul %15, %16, %cst_14 {dimension_numbers = #tpu.dot_dimension_numbers<[1], [0], [0], [1], [0, 0, 1, 1], [], []>} : vector<4x2xf32>, vector<2x32xf32>, vector<4x32xf32> -> vector<4x32xf32>
    %c0_15 = arith.constant 0 : index
    %c0_16 = arith.constant 0 : index
    %18 = vector.load %arg5[%c0_15, %c0_16] : memref<1x32xf32, #tpu.memory_space<vmem>>, vector<1x32xf32>
    %19 = vector.broadcast %18 : vector<1x32xf32> to vector<4x32xf32>
    %20 = arith.addf %17, %19 : vector<4x32xf32>
    %21 = vector.extract_strided_slice %20 {offsets = [0, 0], sizes = [2, 32], strides = [1, 1]} : vector<4x32xf32> to vector<2x32xf32>
    %22 = vector.extract_strided_slice %20 {offsets = [2, 0], sizes = [2, 32], strides = [1, 1]} : vector<4x32xf32> to vector<2x32xf32>
    %23 = arith.addf %21, %22 : vector<2x32xf32>
    %24 = arith.negf %23 : vector<2x32xf32>
    %25 = math.exp %24 : vector<2x32xf32>
    %cst_17 = arith.constant 1.000000e+00 : f32
    %26 = vector.broadcast %cst_17 : f32 to vector<2x32xf32>
    %27 = arith.addf %26, %25 : vector<2x32xf32>
    %28 = arith.divf %26, %27 : vector<2x32xf32>
    %29 = vector.shape_cast %28 : vector<2x32xf32> to vector<2x32x1xf32>
    %30 = vector.shape_cast %29 : vector<2x32x1xf32> to vector<2x32x1xf32>
    %31 = vector.broadcast %30 : vector<2x32x1xf32> to vector<2x32x256xf32>
    %c0_18 = arith.constant 0 : index
    %c0_19 = arith.constant 0 : index
    %c0_20 = arith.constant 0 : index
    %32 = vector.load %arg1[%c0_18, %c0_19, %c0_20] : memref<2x32x256xf32, #tpu.memory_space<vmem>>, vector<2x32x256xf32>
    %33 = arith.mulf %32, %31 : vector<2x32x256xf32>
    %c0_21 = arith.constant 0 : index
    %c0_22 = arith.constant 0 : index
    %c0_23 = arith.constant 0 : index
    %34 = vector.load %arg6[%c0_21, %c0_22, %c0_23] : memref<2x32x256xf32, #tpu.memory_space<vmem>>, vector<2x32x256xf32>
    tpu.vector_store %arg6[%c0_21, %c0_22, %c0_23], %33 {strides = array<i32>} : memref<2x32x256xf32, #tpu.memory_space<vmem>>, vector<2x32x256xf32>,
    return
  }
  func.func @transform_0(%arg0: i32) -> (i32, i32, i32) {
    %c0_i32 = arith.constant 0 : i32
    %c0_i32_0 = arith.constant 0 : i32
    %c0_i32_1 = arith.constant 0 : i32
    return %arg0, %c0_i32, %c0_i32_0 : i32, i32, i32
  }
  func.func @transform_1(%arg0: i32) -> (i32, i32) {
    %c0_i32 = arith.constant 0 : i32
    %c0_i32_0 = arith.constant 0 : i32
    %c0_i32_1 = arith.constant 0 : i32
    return %c0_i32, %c0_i32_0 : i32, i32
  }
  func.func @transform_2(%arg0: i32) -> (i32, i32) {
    %c0_i32 = arith.constant 0 : i32
    %c0_i32_0 = arith.constant 0 : i32
    %c0_i32_1 = arith.constant 0 : i32
    return %c0_i32, %c0_i32_0 : i32, i32
  }
  func.func @transform_3(%arg0: i32) -> (i32, i32) {
    %c0_i32 = arith.constant 0 : i32
    %c0_i32_0 = arith.constant 0 : i32
    %c0_i32_1 = arith.constant 0 : i32
    return %c0_i32, %c0_i32_0 : i32, i32
  }
  func.func @transform_4(%arg0: i32) -> (i32, i32) {
    %c0_i32 = arith.constant 0 : i32
    %c0_i32_0 = arith.constant 0 : i32
    %c0_i32_1 = arith.constant 0 : i32
    return %c0_i32, %c0_i32_0 : i32, i32
  }
  func.func @transform_5(%arg0: i32) -> (i32, i32, i32) {
    %c0_i32 = arith.constant 0 : i32
    %c0_i32_0 = arith.constant 0 : i32
    %c0_i32_1 = arith.constant 0 : i32
    return %arg0, %c0_i32, %c0_i32_0 : i32, i32, i32
  }
}

</mosaic_0001>

<llo_original>
// kernel: tpu_custom_call.1
$region0: #{tpu_custom_call.1}
  #allocation0 [shape = 'u32[]', space=smem, size = 0x4, offset = 0x4, fixed_abs, tag = 'smem constant byte address 0x4 - core index']
  #allocation1 [shape = 'u32[144,128]{1,0:T(1,128)}', space=vmem, size = 0x12000, scoped, tag = 'internal scratch']
  %s0 = inlined_call_operand.hbm [shape: f32[2,32,256], index: 0, kind: input, shape index: {}]
  %s1 = inlined_call_operand.vmem [shape: f32[32,2], index: 1, kind: input, shape index: {}]
  %s2 = inlined_call_operand.vmem [shape: f32[1,2], index: 2, kind: input, shape index: {}]
  %s3 = inlined_call_operand.vmem [shape: f32[2,32], index: 3, kind: input, shape index: {}]
  %s4 = inlined_call_operand.vmem [shape: f32[1,32], index: 4, kind: input, shape index: {}]
  %s5 = inlined_call_operand.hbm [shape: f32[2,32,256], index: 5, kind: output, shape index: {}]
  %s6 = sld [smem:[#allocation0]]
  $region34: #{tpu_custom_call.1} parent=0
    _
  %s8 = ssub.s32 1, %s6
  %s9 = scalar_select 0, %s8, %s6
  $region1: #{tpu_custom_call.1} parent=0
    #allocation2 [shape = 'u8[65536]{0}', space=vmem, size = 0x10000, scoped, tag = 'input window, operand 0, single buffered']
    #allocation3 [shape = 's32[1]{0}', space=sflag, size = 0x4, scoped, tag = 'scoped memory for tpu_custom_call.1']
    #allocation4 [shape = 's32[1]{0}', space=sflag, size = 0x4, scoped, tag = 'scoped memory for tpu_custom_call.1']
    #allocation5 [shape = 'u8[65536]{0}', space=vmem, size = 0x10000, scoped, tag = 'output window, operand 0, single buffered']
    %10 = vsyncpa [#allocation3], 0
    %11 = vsyncpa [#allocation4], 0
    // Predicated region
    $region2: #{tpu_custom_call.1} parent=1 // pred_check
      _
    $region3: #{tpu_custom_call.1} parent=1 // pred_check_branch
      %13 = sbr.rel (0) target = $region5
    $region4: #{tpu_custom_call.1} parent=1 // pred_region
      %s15 = ssub.s32 2048, 2048
      %16 = vsyncadd [#allocation3], %s15
      %s17 = sshll.u32 [#allocation2], 4
      %s18 = int_to_ptr.vmem [resolvable:$true] %s17
      %23 = dma.hbm_to_vmem [thread:$0]  %s0, 2048, %s18, [#allocation3], 256, 256, 16
    $region5: #{tpu_custom_call.1} parent=1 // pred_fallthru
      _
    // Predicated region
    $region6: #{tpu_custom_call.1} parent=1 // pred_check
      _
    $region7: #{tpu_custom_call.1} parent=1 // pred_check_branch
      %25 = sbr.rel (0) target = $region9
    $region8: #{tpu_custom_call.1} parent=1 // pred_region
      _
    $region9: #{tpu_custom_call.1} parent=1 // pred_fallthru
      _
    // Predicated region
    $region10: #{tpu_custom_call.1} parent=1 // pred_check
      _
    $region11: #{tpu_custom_call.1} parent=1 // pred_check_branch
      %27 = sbr.rel (0) target = $region13
    $region12: #{tpu_custom_call.1} parent=1 // pred_region
      _
    $region13: #{tpu_custom_call.1} parent=1 // pred_fallthru
      _
    // Predicated region
    $region14: #{tpu_custom_call.1} parent=1 // pred_check
      _
    $region15: #{tpu_custom_call.1} parent=1 // pred_check_branch
      %29 = sbr.rel (0) target = $region17
    $region16: #{tpu_custom_call.1} parent=1 // pred_region
      _
    $region17: #{tpu_custom_call.1} parent=1 // pred_fallthru
      _
    // Predicated region
    $region18: #{tpu_custom_call.1} parent=1 // pred_check
      _
    $region19: #{tpu_custom_call.1} parent=1 // pred_check_branch
      %31 = sbr.rel (0) target = $region21
    $region20: #{tpu_custom_call.1} parent=1 // pred_region
      _
    $region21: #{tpu_custom_call.1} parent=1 // pred_fallthru
      _
    // Predicated region
    $region22: #{tpu_custom_call.1} parent=1 // pred_check
      _
    $region23: #{tpu_custom_call.1} parent=1 // pred_check_branch
      %33 = sbr.rel (0) target = $region25
    $region24: #{tpu_custom_call.1} parent=1 // pred_region
      %34 = dma.done [#allocation3], 2048
    $region25: #{tpu_custom_call.1} parent=1 // pred_fallthru
      _
    %v35 = vld [vmem:[#allocation2] sm:$0xff]
    %v36 = vld [vmem:[#allocation2 + $0x10] sm:$0xff]
    %v37 = vld [vmem:[#allocation2 + $0x20] sm:$0xff]
    %v38 = vld [vmem:[#allocation2 + $0x30] sm:$0xff]
    %v39 = vld [vmem:[#allocation2 + $0x40] sm:$0xff]
    %v40 = vld [vmem:[#allocation2 + $0x50] sm:$0xff]
    %v41 = vld [vmem:[#allocation2 + $0x60] sm:$0xff]
    %v42 = vld [vmem:[#allocation2 + $0x70] sm:$0xff]
    %v43 = vld [vmem:[#allocation2 + $0x8] sm:$0xff]
    %v44 = vld [vmem:[#allocation2 + $0x18] sm:$0xff]
    %v45 = vld [vmem:[#allocation2 + $0x28] sm:$0xff]
    %v46 = vld [vmem:[#allocation2 + $0x38] sm:$0xff]
    %v47 = vld [vmem:[#allocation2 + $0x48] sm:$0xff]
    %v48 = vld [vmem:[#allocation2 + $0x58] sm:$0xff]
    %v49 = vld [vmem:[#allocation2 + $0x68] sm:$0xff]
    %v50 = vld [vmem:[#allocation2 + $0x78] sm:$0xff]
    %v51 = vadd.f32 %v35, %v43
    %v52 = vadd.f32 %v36, %v44
    %v53 = vadd.f32 %v37, %v45
    %v54 = vadd.f32 %v38, %v46
    %v55 = vadd.f32 %v39, %v47
    %v56 = vadd.f32 %v40, %v48
    %v57 = vadd.f32 %v41, %v49
    %v58 = vadd.f32 %v42, %v50
    %v59 = vmax.f32 %v35, %v43
    %v60 = vmax.f32 %v36, %v44
    %v61 = vmax.f32 %v37, %v45
    %v62 = vmax.f32 %v38, %v46
    %v63 = vmax.f32 %v39, %v47
    %v64 = vmax.f32 %v40, %v48
    %v65 = vmax.f32 %v41, %v49
    %v66 = vmax.f32 %v42, %v50
    %67 = vadd.xlane.f32.xlu0 %v51
    %v68 = vpop.xlane.xlu0 %67
    %69 = vadd.xlane.f32.xlu0 %v52
    %v70 = vpop.xlane.xlu0 %69
    %71 = vadd.xlane.f32.xlu0 %v53
    %v72 = vpop.xlane.xlu0 %71
    %73 = vadd.xlane.f32.xlu0 %v54
    %v74 = vpop.xlane.xlu0 %73
    %75 = vadd.xlane.f32.xlu0 %v55
    %v76 = vpop.xlane.xlu0 %75
    %77 = vadd.xlane.f32.xlu0 %v56
    %v78 = vpop.xlane.xlu0 %77
    %79 = vadd.xlane.f32.xlu0 %v57
    %v80 = vpop.xlane.xlu0 %79
    %81 = vadd.xlane.f32.xlu0 %v58
    %v82 = vpop.xlane.xlu0 %81
    %83 = vmax.xlane.f32.xlu0 %v59
    %v84 = vpop.xlane.xlu0 %83
    %85 = vmax.xlane.f32.xlu0 %v60
    %v86 = vpop.xlane.xlu0 %85
    %87 = vmax.xlane.f32.xlu0 %v61
    %v88 = vpop.xlane.xlu0 %87
    %89 = vmax.xlane.f32.xlu0 %v62
    %v90 = vpop.xlane.xlu0 %89
    %91 = vmax.xlane.f32.xlu0 %v63
    %v92 = vpop.xlane.xlu0 %91
    %93 = vmax.xlane.f32.xlu0 %v64
    %v94 = vpop.xlane.xlu0 %93
    %95 = vmax.xlane.f32.xlu0 %v65
    %v96 = vpop.xlane.xlu0 %95
    %97 = vmax.xlane.f32.xlu0 %v66
    %v98 = vpop.xlane.xlu0 %97
    %v99 = vmul.f32 %v68, 0.00390625
    %v100 = vmul.f32 %v70, 0.00390625
    %v101 = vmul.f32 %v72, 0.00390625
    %v102 = vmul.f32 %v74, 0.00390625
    %v103 = vmul.f32 %v76, 0.00390625
    %v104 = vmul.f32 %v78, 0.00390625
    %v105 = vmul.f32 %v80, 0.00390625
    %v106 = vmul.f32 %v82, 0.00390625
    %v115 = vlaneseq
    %v116 = vand.u32 %v115, 127
    %v117 = vlaneseq
    %v118 = vshrl.u32 %v117, 7
    %v119 = vsub.s32 %v116, %v118
    %v120 = vrot.slane %v99, %v119
    %v121 = vadd.s32 %v116, 4294967288
    %v122 = vlaneseq
    %v123 = vshrl.u32 %v122, 7
    %v124 = vsub.s32 %v121, %v123
    %v125 = vrot.slane %v100, %v124
    %vm126 = vcmask 130112
    %v127 = vsel %vm126, %v125, %v120
    %v128 = vadd.s32 %v116, 4294967280
    %v129 = vlaneseq
    %v130 = vshrl.u32 %v129, 7
    %v131 = vsub.s32 %v128, %v130
    %v132 = vrot.slane %v101, %v131
    %vm133 = vcmask 195712
    %v134 = vsel %vm133, %v132, %v127
    %v135 = vadd.s32 %v116, 4294967272
    %v136 = vlaneseq
    %v137 = vshrl.u32 %v136, 7
    %v138 = vsub.s32 %v135, %v137
    %v139 = vrot.slane %v102, %v138
    %vm140 = vcmask 261312
    %v141 = vsel %vm140, %v139, %v134
    %v142 = vlaneseq
    %v143 = vshrl.u32 %v142, 7
    %v144 = vsub.s32 %v116, %v143
    %v145 = vrot.slane %v103, %v144
    %v146 = vlaneseq
    %v147 = vshrl.u32 %v146, 7
    %v148 = vsub.s32 %v121, %v147
    %v149 = vrot.slane %v104, %v148
    %v150 = vsel %vm126, %v149, %v145
    %v151 = vlaneseq
    %v152 = vshrl.u32 %v151, 7
    %v153 = vsub.s32 %v128, %v152
    %v154 = vrot.slane %v105, %v153
    %v155 = vsel %vm133, %v154, %v150
    %v156 = vlaneseq
    %v157 = vshrl.u32 %v156, 7
    %v158 = vsub.s32 %v135, %v157
    %v159 = vrot.slane %v106, %v158
    %v160 = vsel %vm140, %v159, %v155
    %vm161 = vcmask 1041409
    %v162 = vsel %vm161, %v160, %v141
    %v172 = vlaneseq
    %v173 = vshrl.u32 %v172, 7
    %v174 = vsub.s32 %v116, %v173
    %v175 = vrot.slane %v84, %v174
    %v176 = vlaneseq
    %v177 = vshrl.u32 %v176, 7
    %v178 = vsub.s32 %v121, %v177
    %v179 = vrot.slane %v86, %v178
    %v180 = vsel %vm126, %v179, %v175
    %v181 = vlaneseq
    %v182 = vshrl.u32 %v181, 7
    %v183 = vsub.s32 %v128, %v182
    %v184 = vrot.slane %v88, %v183
    %v185 = vsel %vm133, %v184, %v180
    %v186 = vlaneseq
    %v187 = vshrl.u32 %v186, 7
    %v188 = vsub.s32 %v135, %v187
    %v189 = vrot.slane %v90, %v188
    %v190 = vsel %vm140, %v189, %v185
    %v191 = vlaneseq
    %v192 = vshrl.u32 %v191, 7
    %v193 = vsub.s32 %v116, %v192
    %v194 = vrot.slane %v92, %v193
    %v195 = vlaneseq
    %v196 = vshrl.u32 %v195, 7
    %v197 = vsub.s32 %v121, %v196
    %v198 = vrot.slane %v94, %v197
    %v199 = vsel %vm126, %v198, %v194
    %v200 = vlaneseq
    %v201 = vshrl.u32 %v200, 7
    %v202 = vsub.s32 %v128, %v201
    %v203 = vrot.slane %v96, %v202
    %v204 = vsel %vm133, %v203, %v199
    %v205 = vlaneseq
    %v206 = vshrl.u32 %v205, 7
    %v207 = vsub.s32 %v135, %v206
    %v208 = vrot.slane %v98, %v207
    %v209 = vsel %vm140, %v208, %v204
    %vm210 = vcmask 1043459
    %v211 = vsel %vm210, %v209, %v190
    %vm213 = vcmask 1041408
    %v214 = vsel %vm213, %v162, %v211
    %v215 = vld [vmem:[%s1] sm:$0xff]
    %v216 = vld [vmem:[%s1 + $0x8] sm:$0xff]
    %v217 = vld [vmem:[%s1 + $0x10] sm:$0xff]
    %v218 = vld [vmem:[%s1 + $0x18] sm:$0xff]
    %v219 = vld [vmem:[%s2] sm:$0x1]
    %v221 = vlaneseq
    %v222 = vshrl.u32 %v221, 7
    %v223 = vsub.s32 0, %v222
    %v224 = vrot.slane %v219, %v223
    %vm226 = vcmask 261120
    %v228 = vsel %vm226, %v214, 0
    %230 = vmatprep.subr.mxu0 0.0
    %231 = vmatpush1.msra.mxu0 %v215
    %232 = vmatprep.subr.mxu0 0.0
    %233 = vmatpush1.msra.mxu0 %v216
    %234 = vmatprep.subr.mxu0 0.0
    %235 = vmatpush1.msra.mxu0 %v217
    %236 = vmatprep.subr.mxu0 0.0
    %237 = vmatpush1.msra.mxu0 %v218
    %238 = vmatprep.subr.mxu0 0.0
    %239 = vmatpush1.msra.mxu0 0.0
    %240 = vmatprep.subr.mxu0 0.0
    %241 = vmatpush1.msra.mxu0 0.0
    %242 = vmatprep.subr.mxu0 0.0
    %243 = vmatpush1.msra.mxu0 0.0
    %244 = vmatprep.subr.mxu0 0.0
    %245 = vmatpush1.msra.mxu0 0.0
    %246 = vmatprep.subr.mxu0 0.0
    %247 = vmatpush1.msra.mxu0 0.0
    %248 = vmatprep.subr.mxu0 0.0
    %249 = vmatpush1.msra.mxu0 0.0
    %250 = vmatprep.subr.mxu0 0.0
    %251 = vmatpush1.msra.mxu0 0.0
    %252 = vmatprep.subr.mxu0 0.0
    %253 = vmatpush1.msra.mxu0 0.0
    %254 = vmatprep.subr.mxu0 0.0
    %255 = vmatpush1.msra.mxu0 0.0
    %256 = vmatprep.subr.mxu0 0.0
    %257 = vmatpush1.msra.mxu0 0.0
    %258 = vmatprep.subr.mxu0 0.0
    %259 = vmatpush1.msra.mxu0 0.0
    %260 = vmatprep.subr.mxu0 0.0
    %261 = vmatpush1.msra.mxu0 0.0
    %262 = vmatprep.subr.mxu0 0.0
    %263 = vmatpush1.msra.mxu0 0.0
    %264 = vmatprep.subr.mxu0 0.0
    %265 = vmatpush1.msra.mxu0 0.0
    %266 = vmatprep.subr.mxu0 0.0
    %267 = vmatpush1.msra.mxu0 0.0
    %268 = vmatprep.subr.mxu0 0.0
    %269 = vmatpush1.msra.mxu0 0.0
    %270 = vmatprep.subr.mxu0 0.0
    %271 = vmatpush1.msra.mxu0 0.0
    %272 = vmatprep.subr.mxu0 0.0
    %273 = vmatpush1.msra.mxu0 0.0
    %274 = vmatprep.subr.mxu0 0.0
    %275 = vmatpush1.msra.mxu0 0.0
    %276 = vmatprep.subr.mxu0 0.0
    %277 = vmatpush1.msra.mxu0 0.0
    %278 = vmatprep.subr.mxu0 0.0
    %279 = vmatpush1.msra.mxu0 0.0
    %280 = vmatprep.subr.mxu0 0.0
    %281 = vmatpush1.msra.mxu0 0.0
    %282 = vmatprep.subr.mxu0 0.0
    %283 = vmatpush1.msra.mxu0 0.0
    %284 = vmatprep.subr.mxu0 0.0
    %285 = vmatpush1.msra.mxu0 0.0
    %286 = vmatprep.subr.mxu0 0.0
    %287 = vmatpush1.msra.mxu0 0.0
    %288 = vmatprep.subr.mxu0 0.0
    %289 = vmatpush1.msra.mxu0 0.0
    %290 = vmatprep.subr.mxu0 0.0
    %291 = vmatpush1.msra.mxu0 0.0
    %292 = vmatprep.subr.mxu0 0.0
    %293 = vmatpush1.msra.mxu0 0.0
    %294 = vmatprep.mubr.f32.mxu0 0.0
    %295 = vmatmul.mubr.f32.gmra.mrb[0].mxu0 %v228
    %v296 = vpop.f32.mrb[0].mxu0
    %v297 = vadd.f32 %v224, %v296
    %v298 = vpop.f32.mrb[0].mxu0
    %299 = vdwg.mxu0
    %v300 = vmax.f32 %v297, 0.0
    %v301 = vld [vmem:[%s3] sm:$0x3]
    %v302 = vld [vmem:[%s4] sm:$0x1]
    %v304 = vlaneseq
    %v305 = vshrl.u32 %v304, 7
    %v306 = vsub.s32 0, %v305
    %v307 = vrot.slane %v302, %v306
    %vm309 = vcmask 15360
    %v311 = vsel %vm309, %v300, 0
    %v314 = vsel %vm213, %v301, 0
    %316 = vmatprep.subr.mxu0 0.0
    %317 = vmatpush1.msra.mxu0 %v314
    %318 = vmatprep.subr.mxu0 0.0
    %319 = vmatpush1.msra.mxu0 0.0
    %320 = vmatprep.subr.mxu0 0.0
    %321 = vmatpush1.msra.mxu0 0.0
    %322 = vmatprep.subr.mxu0 0.0
    %323 = vmatpush1.msra.mxu0 0.0
    %324 = vmatprep.subr.mxu0 0.0
    %325 = vmatpush1.msra.mxu0 0.0
    %326 = vmatprep.subr.mxu0 0.0
    %327 = vmatpush1.msra.mxu0 0.0
    %328 = vmatprep.subr.mxu0 0.0
    %329 = vmatpush1.msra.mxu0 0.0
    %330 = vmatprep.subr.mxu0 0.0
    %331 = vmatpush1.msra.mxu0 0.0
    %332 = vmatprep.subr.mxu0 0.0
    %333 = vmatpush1.msra.mxu0 0.0
    %334 = vmatprep.subr.mxu0 0.0
    %335 = vmatpush1.msra.mxu0 0.0
    %336 = vmatprep.subr.mxu0 0.0
    %337 = vmatpush1.msra.mxu0 0.0
    %338 = vmatprep.subr.mxu0 0.0
    %339 = vmatpush1.msra.mxu0 0.0
    %340 = vmatprep.subr.mxu0 0.0
    %341 = vmatpush1.msra.mxu0 0.0
    %342 = vmatprep.subr.mxu0 0.0
    %343 = vmatpush1.msra.mxu0 0.0
    %344 = vmatprep.subr.mxu0 0.0
    %345 = vmatpush1.msra.mxu0 0.0
    %346 = vmatprep.subr.mxu0 0.0
    %347 = vmatpush1.msra.mxu0 0.0
    %348 = vmatprep.subr.mxu0 0.0
    %349 = vmatpush1.msra.mxu0 0.0
    %350 = vmatprep.subr.mxu0 0.0
    %351 = vmatpush1.msra.mxu0 0.0
    %352 = vmatprep.subr.mxu0 0.0
    %353 = vmatpush1.msra.mxu0 0.0
    %354 = vmatprep.subr.mxu0 0.0
    %355 = vmatpush1.msra.mxu0 0.0
    %356 = vmatprep.subr.mxu0 0.0
    %357 = vmatpush1.msra.mxu0 0.0
    %358 = vmatprep.subr.mxu0 0.0
    %359 = vmatpush1.msra.mxu0 0.0
    %360 = vmatprep.subr.mxu0 0.0
    %361 = vmatpush1.msra.mxu0 0.0
    %362 = vmatprep.subr.mxu0 0.0
    %363 = vmatpush1.msra.mxu0 0.0
    %364 = vmatprep.subr.mxu0 0.0
    %365 = vmatpush1.msra.mxu0 0.0
    %366 = vmatprep.subr.mxu0 0.0
    %367 = vmatpush1.msra.mxu0 0.0
    %368 = vmatprep.subr.mxu0 0.0
    %369 = vmatpush1.msra.mxu0 0.0
    %370 = vmatprep.subr.mxu0 0.0
    %371 = vmatpush1.msra.mxu0 0.0
    %372 = vmatprep.subr.mxu0 0.0
    %373 = vmatpush1.msra.mxu0 0.0
    %374 = vmatprep.subr.mxu0 0.0
    %375 = vmatpush1.msra.mxu0 0.0
    %376 = vmatprep.subr.mxu0 0.0
    %377 = vmatpush1.msra.mxu0 0.0
    %378 = vmatprep.subr.mxu0 0.0
    %379 = vmatpush1.msra.mxu0 0.0
    %380 = vmatprep.mubr.f32.mxu0 0.0
    %381 = vmatmul.mubr.f32.gmra.mrb[0].mxu0 %v311
    %v382 = vpop.f32.mrb[0].mxu0
    %v383 = vadd.f32 %v307, %v382
    %v384 = vpop.f32.mrb[0].mxu0
    %385 = vdwg.mxu0
    %v387 = vrot.slane %v383, 2
    %v389 = vadd.f32 %v383, %v387
    %v390 = vxor.u32 %v389, 2147483648
    %v391 = vmul.f32 %v390, 1.442695
    %v392 = vpow.pop %v391
    %v393 = vadd.f32 %v392, 1.0
    %v394 = vrcp.pop %v393
    %v395 = vmul.f32 1.0, %v394
    %v396 = vlaneseq
    %v397 = vshrl.u32 %v396, 7
    %v398 = vsub.s32 0, %v397
    %v399 = vrot.slane %v395, %v398
    %401 = vbcast.lane.b32.xlu0 %v399, 256
    %v402 = vpop.permute.xlu0 %401
    %s404 = sor.u32 256, 8
    %405 = vbcast.lane.b32.xlu0 %v399, %s404
    %v406 = vpop.permute.xlu0 %405
    %s408 = sor.u32 256, 16
    %409 = vbcast.lane.b32.xlu0 %v399, %s408
    %v410 = vpop.permute.xlu0 %409
    %s412 = sor.u32 256, 24
    %413 = vbcast.lane.b32.xlu0 %v399, %s412
    %v414 = vpop.permute.xlu0 %413
    %v415 = vlaneseq
    %v416 = vshrl.u32 %v415, 7
    %v417 = vsub.s32 1, %v416
    %v418 = vrot.slane %v395, %v417
    %420 = vbcast.lane.b32.xlu0 %v418, 256
    %v421 = vpop.permute.xlu0 %420
    %s423 = sor.u32 256, 8
    %424 = vbcast.lane.b32.xlu0 %v418, %s423
    %v425 = vpop.permute.xlu0 %424
    %s427 = sor.u32 256, 16
    %428 = vbcast.lane.b32.xlu0 %v418, %s427
    %v429 = vpop.permute.xlu0 %428
    %s431 = sor.u32 256, 24
    %432 = vbcast.lane.b32.xlu0 %v418, %s431
    %v433 = vpop.permute.xlu0 %432
    %v434 = vld [vmem:[#allocation2] sm:$0xff]
    %v435 = vld [vmem:[#allocation2 + $0x10] sm:$0xff]
    %v436 = vld [vmem:[#allocation2 + $0x20] sm:$0xff]
    %v437 = vld [vmem:[#allocation2 + $0x30] sm:$0xff]
    %v438 = vld [vmem:[#allocation2 + $0x40] sm:$0xff]
    %v439 = vld [vmem:[#allocation2 + $0x50] sm:$0xff]
    %v440 = vld [vmem:[#allocation2 + $0x60] sm:$0xff]
    %v441 = vld [vmem:[#allocation2 + $0x70] sm:$0xff]
    %v442 = vmul.f32 %v434, %v402
    %v443 = vmul.f32 %v43, %v402
    %v444 = vmul.f32 %v435, %v406
    %v445 = vmul.f32 %v44, %v406
    %v446 = vmul.f32 %v436, %v410
    %v447 = vmul.f32 %v45, %v410
    %v448 = vmul.f32 %v437, %v414
    %v449 = vmul.f32 %v46, %v414
    %v450 = vmul.f32 %v438, %v421
    %v451 = vmul.f32 %v47, %v421
    %v452 = vmul.f32 %v439, %v425
    %v453 = vmul.f32 %v48, %v425
    %v454 = vmul.f32 %v440, %v429
    %v455 = vmul.f32 %v49, %v429
    %v456 = vmul.f32 %v441, %v433
    %v457 = vmul.f32 %v50, %v433
    %458 = vst [vmem:[#allocation5] sm:$0xff] %v442
    %459 = vst [vmem:[#allocation5 + $0x8] sm:$0xff] %v443
    %460 = vst [vmem:[#allocation5 + $0x10] sm:$0xff] %v444
    %461 = vst [vmem:[#allocation5 + $0x18] sm:$0xff] %v445
    %462 = vst [vmem:[#allocation5 + $0x20] sm:$0xff] %v446
    %463 = vst [vmem:[#allocation5 + $0x28] sm:$0xff] %v447
    %464 = vst [vmem:[#allocation5 + $0x30] sm:$0xff] %v448
    %465 = vst [vmem:[#allocation5 + $0x38] sm:$0xff] %v449
    %466 = vst [vmem:[#allocation5 + $0x40] sm:$0xff] %v450
    %467 = vst [vmem:[#allocation5 + $0x48] sm:$0xff] %v451
    %468 = vst [vmem:[#allocation5 + $0x50] sm:$0xff] %v452
    %469 = vst [vmem:[#allocation5 + $0x58] sm:$0xff] %v453
    %470 = vst [vmem:[#allocation5 + $0x60] sm:$0xff] %v454
    %471 = vst [vmem:[#allocation5 + $0x68] sm:$0xff] %v455
    %472 = vst [vmem:[#allocation5 + $0x70] sm:$0xff] %v456
    %473 = vst [vmem:[#allocation5 + $0x78] sm:$0xff] %v457
    // Predicated region
    $region26: #{tpu_custom_call.1} parent=1 // pred_check
      _
    $region27: #{tpu_custom_call.1} parent=1 // pred_check_branch
      %475 = sbr.rel (0) target = $region29
    $region28: #{tpu_custom_call.1} parent=1 // pred_region
      %s477 = ssub.s32 2048, 2048
      %478 = vsyncadd [#allocation4], %s477
      %s479 = sshll.u32 [#allocation5], 4
      %s480 = int_to_ptr.vmem [resolvable:$true] %s479
      %485 = dma.vmem_to_hbm [thread:$0]  %s480, 2048, %s5, [#allocation4], 256, 256, 16
    $region29: #{tpu_custom_call.1} parent=1 // pred_fallthru
      _
    // Predicated region
    $region30: #{tpu_custom_call.1} parent=1 // pred_check
      _
    $region31: #{tpu_custom_call.1} parent=1 // pred_check_branch
      %487 = sbr.rel (0) target = $region33
    $region32: #{tpu_custom_call.1} parent=1 // pred_region
      %488 = dma.done [#allocation4], 2048
    $region33: #{tpu_custom_call.1} parent=1 // pred_fallthru
      _
    %489 = vsyncpa [#allocation3], 1
    %490 = vsyncpa [#allocation4], 1

// kernel: tpu_custom_call.1
$region0: #{tpu_custom_call.1}
  #allocation0 [shape = 'u32[]', space=smem, size = 0x4, offset = 0x4, fixed_abs, tag = 'smem constant byte address 0x4 - core index']
  #allocation1 [shape = 'u32[144,128]{1,0:T(1,128)}', space=vmem, size = 0x12000, scoped, tag = 'internal scratch']
  %s0 = inlined_call_operand.hbm [shape: f32[2,32,256], index: 0, kind: input, shape index: {}]
  %s1 = inlined_call_operand.vmem [shape: f32[32,2], index: 1, kind: input, shape index: {}]
  %s2 = inlined_call_operand.vmem [shape: f32[1,2], index: 2, kind: input, shape index: {}]
  %s3 = inlined_call_operand.vmem [shape: f32[2,32], index: 3, kind: input, shape index: {}]
  %s4 = inlined_call_operand.vmem [shape: f32[1,32], index: 4, kind: input, shape index: {}]
  %s5 = inlined_call_operand.hbm [shape: f32[2,32,256], index: 5, kind: output, shape index: {}]
  %s6 = sld [smem:[#allocation0]]
  $region34: #{tpu_custom_call.1} parent=0
    _
  %s8 = ssub.s32 1, %s6
  %s9 = scalar_select 0, %s8, %s6
  $region1: #{tpu_custom_call.1} parent=0
    #allocation2 [shape = 'u8[65536]{0}', space=vmem, size = 0x10000, scoped, tag = 'input window, operand 0, single buffered']
    #allocation3 [shape = 's32[1]{0}', space=sflag, size = 0x4, scoped, tag = 'scoped memory for tpu_custom_call.1']
    #allocation4 [shape = 's32[1]{0}', space=sflag, size = 0x4, scoped, tag = 'scoped memory for tpu_custom_call.1']
    #allocation5 [shape = 'u8[65536]{0}', space=vmem, size = 0x10000, scoped, tag = 'output window, operand 0, single buffered']
    %10 = vsyncpa [#allocation3], 0
    %11 = vsyncpa [#allocation4], 0
    // Predicated region
    $region2: #{tpu_custom_call.1} parent=1 // pred_check
      _
    $region3: #{tpu_custom_call.1} parent=1 // pred_check_branch
      %13 = sbr.rel (0) target = $region5
    $region4: #{tpu_custom_call.1} parent=1 // pred_region
      %s15 = ssub.s32 2048, 2048
      %16 = vsyncadd [#allocation3], %s15
      %s17 = sshll.u32 [#allocation2], 4
      %s18 = int_to_ptr.vmem [resolvable:$true] %s17
      %23 = dma.hbm_to_vmem [thread:$0]  %s0, 2048, %s18, [#allocation3], 256, 256, 16
    $region5: #{tpu_custom_call.1} parent=1 // pred_fallthru
      _
    // Predicated region
    $region6: #{tpu_custom_call.1} parent=1 // pred_check
      _
    $region7: #{tpu_custom_call.1} parent=1 // pred_check_branch
      %25 = sbr.rel (0) target = $region9
    $region8: #{tpu_custom_call.1} parent=1 // pred_region
      _
    $region9: #{tpu_custom_call.1} parent=1 // pred_fallthru
      _
    // Predicated region
    $region10: #{tpu_custom_call.1} parent=1 // pred_check
      _
    $region11: #{tpu_custom_call.1} parent=1 // pred_check_branch
      %27 = sbr.rel (0) target = $region13
    $region12: #{tpu_custom_call.1} parent=1 // pred_region
      _
    $region13: #{tpu_custom_call.1} parent=1 // pred_fallthru
      _
    // Predicated region
    $region14: #{tpu_custom_call.1} parent=1 // pred_check
      _
    $region15: #{tpu_custom_call.1} parent=1 // pred_check_branch
      %29 = sbr.rel (0) target = $region17
    $region16: #{tpu_custom_call.1} parent=1 // pred_region
      _
    $region17: #{tpu_custom_call.1} parent=1 // pred_fallthru
      _
    // Predicated region
    $region18: #{tpu_custom_call.1} parent=1 // pred_check
      _
    $region19: #{tpu_custom_call.1} parent=1 // pred_check_branch
      %31 = sbr.rel (0) target = $region21
    $region20: #{tpu_custom_call.1} parent=1 // pred_region
      _
    $region21: #{tpu_custom_call.1} parent=1 // pred_fallthru
      _
    // Predicated region
    $region22: #{tpu_custom_call.1} parent=1 // pred_check
      _
    $region23: #{tpu_custom_call.1} parent=1 // pred_check_branch
      %33 = sbr.rel (0) target = $region25
    $region24: #{tpu_custom_call.1} parent=1 // pred_region
      %34 = dma.done [#allocation3], 2048
    $region25: #{tpu_custom_call.1} parent=1 // pred_fallthru
      _
    %v35 = vld [vmem:[#allocation2] sm:$0xff]
    %v36 = vld [vmem:[#allocation2 + $0x10] sm:$0xff]
    %v37 = vld [vmem:[#allocation2 + $0x20] sm:$0xff]
    %v38 = vld [vmem:[#allocation2 + $0x30] sm:$0xff]
    %v39 = vld [vmem:[#allocation2 + $0x40] sm:$0xff]
    %v40 = vld [vmem:[#allocation2 + $0x50] sm:$0xff]
    %v41 = vld [vmem:[#allocation2 + $0x60] sm:$0xff]
    %v42 = vld [vmem:[#allocation2 + $0x70] sm:$0xff]
    %v43 = vld [vmem:[#allocation2 + $0x8] sm:$0xff]
    %v44 = vld [vmem:[#allocation2 + $0x18] sm:$0xff]
    %v45 = vld [vmem:[#allocation2 + $0x28] sm:$0xff]
    %v46 = vld [vmem:[#allocation2 + $0x38] sm:$0xff]
    %v47 = vld [vmem:[#allocation2 + $0x48] sm:$0xff]
    %v48 = vld [vmem:[#allocation2 + $0x58] sm:$0xff]
    %v49 = vld [vmem:[#allocation2 + $0x68] sm:$0xff]
    %v50 = vld [vmem:[#allocation2 + $0x78] sm:$0xff]
    %v51 = vadd.f32 %v35, %v43
    %v52 = vadd.f32 %v36, %v44
    %v53 = vadd.f32 %v37, %v45
    %v54 = vadd.f32 %v38, %v46
    %v55 = vadd.f32 %v39, %v47
    %v56 = vadd.f32 %v40, %v48
    %v57 = vadd.f32 %v41, %v49
    %v58 = vadd.f32 %v42, %v50
    %v59 = vmax.f32 %v35, %v43
    %v60 = vmax.f32 %v36, %v44
    %v61 = vmax.f32 %v37, %v45
    %v62 = vmax.f32 %v38, %v46
    %v63 = vmax.f32 %v39, %v47
    %v64 = vmax.f32 %v40, %v48
    %v65 = vmax.f32 %v41, %v49
    %v66 = vmax.f32 %v42, %v50
    %67 = vadd.xlane.f32.xlu0 %v51
    %v68 = vpop.xlane.xlu0 %67
    %69 = vadd.xlane.f32.xlu0 %v52
    %v70 = vpop.xlane.xlu0 %69
    %71 = vadd.xlane.f32.xlu0 %v53
    %v72 = vpop.xlane.xlu0 %71
    %73 = vadd.xlane.f32.xlu0 %v54
    %v74 = vpop.xlane.xlu0 %73
    %75 = vadd.xlane.f32.xlu0 %v55
    %v76 = vpop.xlane.xlu0 %75
    %77 = vadd.xlane.f32.xlu0 %v56
    %v78 = vpop.xlane.xlu0 %77
    %79 = vadd.xlane.f32.xlu0 %v57
    %v80 = vpop.xlane.xlu0 %79
    %81 = vadd.xlane.f32.xlu0 %v58
    %v82 = vpop.xlane.xlu0 %81
    %83 = vmax.xlane.f32.xlu0 %v59
    %v84 = vpop.xlane.xlu0 %83
    %85 = vmax.xlane.f32.xlu0 %v60
    %v86 = vpop.xlane.xlu0 %85
    %87 = vmax.xlane.f32.xlu0 %v61
    %v88 = vpop.xlane.xlu0 %87
    %89 = vmax.xlane.f32.xlu0 %v62
    %v90 = vpop.xlane.xlu0 %89
    %91 = vmax.xlane.f32.xlu0 %v63
    %v92 = vpop.xlane.xlu0 %91
    %93 = vmax.xlane.f32.xlu0 %v64
    %v94 = vpop.xlane.xlu0 %93
    %95 = vmax.xlane.f32.xlu0 %v65
    %v96 = vpop.xlane.xlu0 %95
    %97 = vmax.xlane.f32.xlu0 %v66
    %v98 = vpop.xlane.xlu0 %97
    %v99 = vmul.f32 %v68, 0.00390625
    %v100 = vmul.f32 %v70, 0.00390625
    %v101 = vmul.f32 %v72, 0.00390625
    %v102 = vmul.f32 %v74, 0.00390625
    %v103 = vmul.f32 %v76, 0.00390625
    %v104 = vmul.f32 %v78, 0.00390625
    %v105 = vmul.f32 %v80, 0.00390625
    %v106 = vmul.f32 %v82, 0.00390625
    %v115 = vlaneseq
    %v116 = vand.u32 %v115, 127
    %v117 = vlaneseq
    %v118 = vshrl.u32 %v117, 7
    %v119 = vsub.s32 %v116, %v118
    %v120 = vrot.slane %v99, %v119
    %v121 = vadd.s32 %v116, 4294967288
    %v122 = vlaneseq
    %v123 = vshrl.u32 %v122, 7
    %v124 = vsub.s32 %v121, %v123
    %v125 = vrot.slane %v100, %v124
    %vm126 = vcmask 130112
    %v127 = vsel %vm126, %v125, %v120
    %v128 = vadd.s32 %v116, 4294967280
    %v129 = vlaneseq
    %v130 = vshrl.u32 %v129, 7
    %v131 = vsub.s32 %v128, %v130
    %v132 = vrot.slane %v101, %v131
    %vm133 = vcmask 195712
    %v134 = vsel %vm133, %v132, %v127
    %v135 = vadd.s32 %v116, 4294967272
    %v136 = vlaneseq
    %v137 = vshrl.u32 %v136, 7
    %v138 = vsub.s32 %v135, %v137
    %v139 = vrot.slane %v102, %v138
    %vm140 = vcmask 261312
    %v141 = vsel %vm140, %v139, %v134
    %v142 = vlaneseq
    %v143 = vshrl.u32 %v142, 7
    %v144 = vsub.s32 %v116, %v143
    %v145 = vrot.slane %v103, %v144
    %v146 = vlaneseq
    %v147 = vshrl.u32 %v146, 7
    %v148 = vsub.s32 %v121, %v147
    %v149 = vrot.slane %v104, %v148
    %v150 = vsel %vm126, %v149, %v145
    %v151 = vlaneseq
    %v152 = vshrl.u32 %v151, 7
    %v153 = vsub.s32 %v128, %v152
    %v154 = vrot.slane %v105, %v153
    %v155 = vsel %vm133, %v154, %v150
    %v156 = vlaneseq
    %v157 = vshrl.u32 %v156, 7
    %v158 = vsub.s32 %v135, %v157
    %v159 = vrot.slane %v106, %v158
    %v160 = vsel %vm140, %v159, %v155
    %vm161 = vcmask 1041409
    %v162 = vsel %vm161, %v160, %v141
    %v172 = vlaneseq
    %v173 = vshrl.u32 %v172, 7
    %v174 = vsub.s32 %v116, %v173
    %v175 = vrot.slane %v84, %v174
    %v176 = vlaneseq
    %v177 = vshrl.u32 %v176, 7
    %v178 = vsub.s32 %v121, %v177
    %v179 = vrot.slane %v86, %v178
    %v180 = vsel %vm126, %v179, %v175
    %v181 = vlaneseq
    %v182 = vshrl.u32 %v181, 7
    %v183 = vsub.s32 %v128, %v182
    %v184 = vrot.slane %v88, %v183
    %v185 = vsel %vm133, %v184, %v180
    %v186 = vlaneseq
    %v187 = vshrl.u32 %v186, 7
    %v188 = vsub.s32 %v135, %v187
    %v189 = vrot.slane %v90, %v188
    %v190 = vsel %vm140, %v189, %v185
    %v191 = vlaneseq
    %v192 = vshrl.u32 %v191, 7
    %v193 = vsub.s32 %v116, %v192
    %v194 = vrot.slane %v92, %v193
    %v195 = vlaneseq
    %v196 = vshrl.u32 %v195, 7
    %v197 = vsub.s32 %v121, %v196
    %v198 = vrot.slane %v94, %v197
    %v199 = vsel %vm126, %v198, %v194
    %v200 = vlaneseq
    %v201 = vshrl.u32 %v200, 7
    %v202 = vsub.s32 %v128, %v201
    %v203 = vrot.slane %v96, %v202
    %v204 = vsel %vm133, %v203, %v199
    %v205 = vlaneseq
    %v206 = vshrl.u32 %v205, 7
    %v207 = vsub.s32 %v135, %v206
    %v208 = vrot.slane %v98, %v207
    %v209 = vsel %vm140, %v208, %v204
    %vm210 = vcmask 1043459
    %v211 = vsel %vm210, %v209, %v190
    %vm213 = vcmask 1041408
    %v214 = vsel %vm213, %v162, %v211
    %v215 = vld [vmem:[%s1] sm:$0xff]
    %v216 = vld [vmem:[%s1 + $0x8] sm:$0xff]
    %v217 = vld [vmem:[%s1 + $0x10] sm:$0xff]
    %v218 = vld [vmem:[%s1 + $0x18] sm:$0xff]
    %v219 = vld [vmem:[%s2] sm:$0x1]
    %v221 = vlaneseq
    %v222 = vshrl.u32 %v221, 7
    %v223 = vsub.s32 0, %v222
    %v224 = vrot.slane %v219, %v223
    %vm226 = vcmask 261120
    %v228 = vsel %vm226, %v214, 0
    %230 = vmatprep.subr.mxu0 0.0
    %231 = vmatpush1.msra.mxu0 %v215
    %232 = vmatprep.subr.mxu0 0.0
    %233 = vmatpush1.msra.mxu0 %v216
    %234 = vmatprep.subr.mxu0 0.0
    %235 = vmatpush1.msra.mxu0 %v217
    %236 = vmatprep.subr.mxu0 0.0
    %237 = vmatpush1.msra.mxu0 %v218
    %238 = vmatprep.subr.mxu0 0.0
    %239 = vmatpush1.msra.mxu0 0.0
    %240 = vmatprep.subr.mxu0 0.0
    %241 = vmatpush1.msra.mxu0 0.0
    %242 = vmatprep.subr.mxu0 0.0
    %243 = vmatpush1.msra.mxu0 0.0
    %244 = vmatprep.subr.mxu0 0.0
    %245 = vmatpush1.msra.mxu0 0.0
    %246 = vmatprep.subr.mxu0 0.0
    %247 = vmatpush1.msra.mxu0 0.0
    %248 = vmatprep.subr.mxu0 0.0
    %249 = vmatpush1.msra.mxu0 0.0
    %250 = vmatprep.subr.mxu0 0.0
    %251 = vmatpush1.msra.mxu0 0.0
    %252 = vmatprep.subr.mxu0 0.0
    %253 = vmatpush1.msra.mxu0 0.0
    %254 = vmatprep.subr.mxu0 0.0
    %255 = vmatpush1.msra.mxu0 0.0
    %256 = vmatprep.subr.mxu0 0.0
    %257 = vmatpush1.msra.mxu0 0.0
    %258 = vmatprep.subr.mxu0 0.0
    %259 = vmatpush1.msra.mxu0 0.0
    %260 = vmatprep.subr.mxu0 0.0
    %261 = vmatpush1.msra.mxu0 0.0
    %262 = vmatprep.subr.mxu0 0.0
    %263 = vmatpush1.msra.mxu0 0.0
    %264 = vmatprep.subr.mxu0 0.0
    %265 = vmatpush1.msra.mxu0 0.0
    %266 = vmatprep.subr.mxu0 0.0
    %267 = vmatpush1.msra.mxu0 0.0
    %268 = vmatprep.subr.mxu0 0.0
    %269 = vmatpush1.msra.mxu0 0.0
    %270 = vmatprep.subr.mxu0 0.0
    %271 = vmatpush1.msra.mxu0 0.0
    %272 = vmatprep.subr.mxu0 0.0
    %273 = vmatpush1.msra.mxu0 0.0
    %274 = vmatprep.subr.mxu0 0.0
    %275 = vmatpush1.msra.mxu0 0.0
    %276 = vmatprep.subr.mxu0 0.0
    %277 = vmatpush1.msra.mxu0 0.0
    %278 = vmatprep.subr.mxu0 0.0
    %279 = vmatpush1.msra.mxu0 0.0
    %280 = vmatprep.subr.mxu0 0.0
    %281 = vmatpush1.msra.mxu0 0.0
    %282 = vmatprep.subr.mxu0 0.0
    %283 = vmatpush1.msra.mxu0 0.0
    %284 = vmatprep.subr.mxu0 0.0
    %285 = vmatpush1.msra.mxu0 0.0
    %286 = vmatprep.subr.mxu0 0.0
    %287 = vmatpush1.msra.mxu0 0.0
    %288 = vmatprep.subr.mxu0 0.0
    %289 = vmatpush1.msra.mxu0 0.0
    %290 = vmatprep.subr.mxu0 0.0
    %291 = vmatpush1.msra.mxu0 0.0
    %292 = vmatprep.subr.mxu0 0.0
    %293 = vmatpush1.msra.mxu0 0.0
    %294 = vmatprep.mubr.f32.mxu0 0.0
    %295 = vmatmul.mubr.f32.gmra.mrb[0].mxu0 %v228
    %v296 = vpop.f32.mrb[0].mxu0
    %v297 = vadd.f32 %v224, %v296
    %v298 = vpop.f32.mrb[0].mxu0
    %299 = vdwg.mxu0
    %v300 = vmax.f32 %v297, 0.0
    %v301 = vld [vmem:[%s3] sm:$0x3]
    %v302 = vld [vmem:[%s4] sm:$0x1]
    %v304 = vlaneseq
    %v305 = vshrl.u32 %v304, 7
    %v306 = vsub.s32 0, %v305
    %v307 = vrot.slane %v302, %v306
    %vm309 = vcmask 15360
    %v311 = vsel %vm309, %v300, 0
    %v314 = vsel %vm213, %v301, 0
    %316 = vmatprep.subr.mxu0 0.0
    %317 = vmatpush1.msra.mxu0 %v314
    %318 = vmatprep.subr.mxu0 0.0
    %319 = vmatpush1.msra.mxu0 0.0
    %320 = vmatprep.subr.mxu0 0.0
    %321 = vmatpush1.msra.mxu0 0.0
    %322 = vmatprep.subr.mxu0 0.0
    %323 = vmatpush1.msra.mxu0 0.0
    %324 = vmatprep.subr.mxu0 0.0
    %325 = vmatpush1.msra.mxu0 0.0
    %326 = vmatprep.subr.mxu0 0.0
    %327 = vmatpush1.msra.mxu0 0.0
    %328 = vmatprep.subr.mxu0 0.0
    %329 = vmatpush1.msra.mxu0 0.0
    %330 = vmatprep.subr.mxu0 0.0
    %331 = vmatpush1.msra.mxu0 0.0
    %332 = vmatprep.subr.mxu0 0.0
    %333 = vmatpush1.msra.mxu0 0.0
    %334 = vmatprep.subr.mxu0 0.0
    %335 = vmatpush1.msra.mxu0 0.0
    %336 = vmatprep.subr.mxu0 0.0
    %337 = vmatpush1.msra.mxu0 0.0
    %338 = vmatprep.subr.mxu0 0.0
    %339 = vmatpush1.msra.mxu0 0.0
    %340 = vmatprep.subr.mxu0 0.0
    %341 = vmatpush1.msra.mxu0 0.0
    %342 = vmatprep.subr.mxu0 0.0
    %343 = vmatpush1.msra.mxu0 0.0
    %344 = vmatprep.subr.mxu0 0.0
    %345 = vmatpush1.msra.mxu0 0.0
    %346 = vmatprep.subr.mxu0 0.0
    %347 = vmatpush1.msra.mxu0 0.0
    %348 = vmatprep.subr.mxu0 0.0
    %349 = vmatpush1.msra.mxu0 0.0
    %350 = vmatprep.subr.mxu0 0.0
    %351 = vmatpush1.msra.mxu0 0.0
    %352 = vmatprep.subr.mxu0 0.0
    %353 = vmatpush1.msra.mxu0 0.0
    %354 = vmatprep.subr.mxu0 0.0
    %355 = vmatpush1.msra.mxu0 0.0
    %356 = vmatprep.subr.mxu0 0.0
    %357 = vmatpush1.msra.mxu0 0.0
    %358 = vmatprep.subr.mxu0 0.0
    %359 = vmatpush1.msra.mxu0 0.0
    %360 = vmatprep.subr.mxu0 0.0
    %361 = vmatpush1.msra.mxu0 0.0
    %362 = vmatprep.subr.mxu0 0.0
    %363 = vmatpush1.msra.mxu0 0.0
    %364 = vmatprep.subr.mxu0 0.0
    %365 = vmatpush1.msra.mxu0 0.0
    %366 = vmatprep.subr.mxu0 0.0
    %367 = vmatpush1.msra.mxu0 0.0
    %368 = vmatprep.subr.mxu0 0.0
    %369 = vmatpush1.msra.mxu0 0.0
    %370 = vmatprep.subr.mxu0 0.0
    %371 = vmatpush1.msra.mxu0 0.0
    %372 = vmatprep.subr.mxu0 0.0
    %373 = vmatpush1.msra.mxu0 0.0
    %374 = vmatprep.subr.mxu0 0.0
    %375 = vmatpush1.msra.mxu0 0.0
    %376 = vmatprep.subr.mxu0 0.0
    %377 = vmatpush1.msra.mxu0 0.0
    %378 = vmatprep.subr.mxu0 0.0
    %379 = vmatpush1.msra.mxu0 0.0
    %380 = vmatprep.mubr.f32.mxu0 0.0
    %381 = vmatmul.mubr.f32.gmra.mrb[0].mxu0 %v311
    %v382 = vpop.f32.mrb[0].mxu0
    %v383 = vadd.f32 %v307, %v382
    %v384 = vpop.f32.mrb[0].mxu0
    %385 = vdwg.mxu0
    %v387 = vrot.slane %v383, 2
    %v389 = vadd.f32 %v383, %v387
    %v390 = vxor.u32 %v389, 2147483648
    %v391 = vmul.f32 %v390, 1.442695
    %v392 = vpow.pop %v391
    %v393 = vadd.f32 %v392, 1.0
    %v394 = vrcp.pop %v393
    %v395 = vmul.f32 1.0, %v394
    %v396 = vlaneseq
    %v397 = vshrl.u32 %v396, 7
    %v398 = vsub.s32 0, %v397
    %v399 = vrot.slane %v395, %v398
    %401 = vbcast.lane.b32.xlu0 %v399, 256
    %v402 = vpop.permute.xlu0 %401
    %s404 = sor.u32 256, 8
    %405 = vbcast.lane.b32.xlu0 %v399, %s404
    %v406 = vpop.permute.xlu0 %405
    %s408 = sor.u32 256, 16
    %409 = vbcast.lane.b32.xlu0 %v399, %s408
    %v410 = vpop.permute.xlu0 %409
    %s412 = sor.u32 256, 24
    %413 = vbcast.lane.b32.xlu0 %v399, %s412
    %v414 = vpop.permute.xlu0 %413
    %v415 = vlaneseq
    %v416 = vshrl.u32 %v415, 7
    %v417 = vsub.s32 1, %v416
    %v418 = vrot.slane %v395, %v417
    %420 = vbcast.lane.b32.xlu0 %v418, 256
    %v421 = vpop.permute.xlu0 %420
    %s423 = sor.u32 256, 8
    %424 = vbcast.lane.b32.xlu0 %v418, %s423
    %v425 = vpop.permute.xlu0 %424
    %s427 = sor.u32 256, 16
    %428 = vbcast.lane.b32.xlu0 %v418, %s427
    %v429 = vpop.permute.xlu0 %428
    %s431 = sor.u32 256, 24
    %432 = vbcast.lane.b32.xlu0 %v418, %s431
    %v433 = vpop.permute.xlu0 %432
    %v434 = vld [vmem:[#allocation2] sm:$0xff]
    %v435 = vld [vmem:[#allocation2 + $0x10] sm:$0xff]
    %v436 = vld [vmem:[#allocation2 + $0x20] sm:$0xff]
    %v437 = vld [vmem:[#allocation2 + $0x30] sm:$0xff]
    %v438 = vld [vmem:[#allocation2 + $0x40] sm:$0xff]
    %v439 = vld [vmem:[#allocation2 + $0x50] sm:$0xff]
    %v440 = vld [vmem:[#allocation2 + $0x60] sm:$0xff]
    %v441 = vld [vmem:[#allocation2 + $0x70] sm:$0xff]
    %v442 = vmul.f32 %v434, %v402
    %v443 = vmul.f32 %v43, %v402
    %v444 = vmul.f32 %v435, %v406
    %v445 = vmul.f32 %v44, %v406
    %v446 = vmul.f32 %v436, %v410
    %v447 = vmul.f32 %v45, %v410
    %v448 = vmul.f32 %v437, %v414
    %v449 = vmul.f32 %v46, %v414
    %v450 = vmul.f32 %v438, %v421
    %v451 = vmul.f32 %v47, %v421
    %v452 = vmul.f32 %v439, %v425
    %v453 = vmul.f32 %v48, %v425
    %v454 = vmul.f32 %v440, %v429
    %v455 = vmul.f32 %v49, %v429
    %v456 = vmul.f32 %v441, %v433
    %v457 = vmul.f32 %v50, %v433
    %458 = vst [vmem:[#allocation5] sm:$0xff] %v442
    %459 = vst [vmem:[#allocation5 + $0x8] sm:$0xff] %v443
    %460 = vst [vmem:[#allocation5 + $0x10] sm:$0xff] %v444
    %461 = vst [vmem:[#allocation5 + $0x18] sm:$0xff] %v445
    %462 = vst [vmem:[#allocation5 + $0x20] sm:$0xff] %v446
    %463 = vst [vmem:[#allocation5 + $0x28] sm:$0xff] %v447
    %464 = vst [vmem:[#allocation5 + $0x30] sm:$0xff] %v448
    %465 = vst [vmem:[#allocation5 + $0x38] sm:$0xff] %v449
    %466 = vst [vmem:[#allocation5 + $0x40] sm:$0xff] %v450
    %467 = vst [vmem:[#allocation5 + $0x48] sm:$0xff] %v451
    %468 = vst [vmem:[#allocation5 + $0x50] sm:$0xff] %v452
    %469 = vst [vmem:[#allocation5 + $0x58] sm:$0xff] %v453
    %470 = vst [vmem:[#allocation5 + $0x60] sm:$0xff] %v454
    %471 = vst [vmem:[#allocation5 + $0x68] sm:$0xff] %v455
    %472 = vst [vmem:[#allocation5 + $0x70] sm:$0xff] %v456
    %473 = vst [vmem:[#allocation5 + $0x78] sm:$0xff] %v457
    // Predicated region
    $region26: #{tpu_custom_call.1} parent=1 // pred_check
      _
    $region27: #{tpu_custom_call.1} parent=1 // pred_check_branch
      %475 = sbr.rel (0) target = $region29
    $region28: #{tpu_custom_call.1} parent=1 // pred_region
      %s477 = ssub.s32 2048, 2048
      %478 = vsyncadd [#allocation4], %s477
      %s479 = sshll.u32 [#allocation5], 4
      %s480 = int_to_ptr.vmem [resolvable:$true] %s479
      %485 = dma.vmem_to_hbm [thread:$0]  %s480, 2048, %s5, [#allocation4], 256, 256, 16
    $region29: #{tpu_custom_call.1} parent=1 // pred_fallthru
      _
    // Predicated region
    $region30: #{tpu_custom_call.1} parent=1 // pred_check
      _
    $region31: #{tpu_custom_call.1} parent=1 // pred_check_branch
      %487 = sbr.rel (0) target = $region33
    $region32: #{tpu_custom_call.1} parent=1 // pred_region
      %488 = dma.done [#allocation4], 2048
    $region33: #{tpu_custom_call.1} parent=1 // pred_fallthru
      _
    %489 = vsyncpa [#allocation3], 1
    %490 = vsyncpa [#allocation4], 1

</llo_original>
